<compile_context>
chip_gen: v5e
topology: v5e:2x2
jax: 0.10.0
libtpu: 0.0.40
codegen_flags: <defaults>
</compile_context>

<pallas_src>
import functools

import jax
import jax.numpy as jnp
from jax.experimental import pallas as pl
from jax.experimental.pallas import tpu as pltpu


def _round_up(x, m):
    return ((x + m - 1) // m) * m


# ----------------------------- Pallas kernel -------------------------------

def dueling_kernel(x_ref, w_ref, b_ref, o_ref, *, in_size, hp, out_size):
    """Fused DuelingNetwork forward on one batch tile.

    x_ref : (TB, in_size)            bf16
    w_ref : (in_size + 4*hp, hp)     bf16   stacked [w1; w2; wh1; wh2; wq]
    b_ref : (8, hp)                  f32    rows 0..4 = b1, b2, bh1, bh2, bq
    o_ref : (TB, out_size)           f32

    All hidden/head widths are pre-padded to hp (=2H=128) lanes with zero
    rows/cols, so padded lanes stay exactly 0 through every ReLU and
    contribute nothing — the math matches the unpadded network exactly.
    """
    relu = lambda t: jnp.maximum(t, 0.0)

    def mm(a, w):
        # MXU matmul: bf16 inputs, f32 accumulation.
        return jnp.dot(a.astype(w.dtype), w, preferred_element_type=jnp.float32)

    r1 = in_size
    r2 = r1 + hp
    r3 = r2 + hp
    r4 = r3 + hp

    x = x_ref[...]                                              # (TB, IN) bf16
    # base MLP (layer_sizes = [64, 64], no predict head)
    h = relu(mm(x, w_ref[0:r1, :]) + b_ref[0:1, :])
    h = relu(mm(h, w_ref[r1:r2, :]) + b_ref[1:2, :])
    # packed heads: lanes [0:H) = value path, [H:2H) = advantage path
    t = relu(mm(h, w_ref[r2:r3, :]) + b_ref[2:3, :])
    t = relu(mm(t, w_ref[r3:r4, :]) + b_ref[3:4, :])
    # predict + dueling combine (V + A - mean(A) pre-folded into wq/bq).
    # The hp-lane padded Q stays in-register; only out_size lanes are stored.
    q = mm(t, w_ref[r4:r4 + hp, :]) + b_ref[4:5, :]
    o_ref[...] = q[:, :out_size].astype(o_ref.dtype)


# --------------------------- Parameter packing ------------------------------

def pack_params(params, in_size, hidden, out_size, weight_dtype=jnp.bfloat16):
    """Pack all 16 DuelingNetwork tensors into one weight + one bias buffer."""
    (w1, b1, w2, b2,
     wv1, bv1, wv2, bv2, wvp, bvp,
     wa1, ba1, wa2, ba2, wap, bap) = params
    H = hidden
    HP = 2 * H                      # padded lane width (128 for H=64)
    f32 = jnp.float32

    # Head layer 1: one wide matmul on the shared trunk activation.
    wh1 = jnp.concatenate([wv1, wa1], axis=1)                   # (H, 2H)
    bh1 = jnp.concatenate([bv1, ba1], axis=1)                   # (1, 2H)

    # Head layer 2: block-diagonal keeps the two paths independent.
    z = jnp.zeros((H, H), f32)
    wh2 = jnp.block([[wv2, z], [z, wa2]])                       # (2H, 2H)
    bh2 = jnp.concatenate([bv2, ba2], axis=1)                   # (1, 2H)

    # q_j = V + A_j - mean_k(A_k) is linear in the layer-2 activation, so the
    # dueling combine folds into the predict matrix / bias.
    wap_c = wap - jnp.mean(wap, axis=1, keepdims=True)          # (H, OUT)
    wq = jnp.concatenate(
        [jnp.broadcast_to(wvp, (H, out_size)), wap_c], axis=0)  # (2H, OUT)
    bq = bvp + bap - jnp.mean(bap, axis=1, keepdims=True)       # (1, OUT)

    # Pad everything to a uniform HP-lane width / HP-row depth with zeros so
    # the whole network is a single stacked (IN + 4*HP, HP) weight buffer.
    def pad_w(w, rows, cols):
        return jnp.pad(w, ((0, rows - w.shape[0]), (0, cols - w.shape[1])))

    def pad_b(b, cols):
        return jnp.pad(b, ((0, 0), (0, cols - b.shape[1])))

    w1p = pad_w(w1, in_size, HP)      # (IN, HP)   cols H:HP zero
    w2p = pad_w(w2, HP, HP)           # zero rows/cols keep padded lanes at 0
    wh1p = pad_w(wh1, HP, HP)
    wh2p = pad_w(wh2, HP, HP)
    wqp = pad_w(wq, HP, HP)           # cols out_size:HP zero (never stored)

    w_packed = jnp.concatenate(
        [w1p, w2p, wh1p, wh2p, wqp], axis=0).astype(weight_dtype)  # (IN+4HP, HP)

    b_rows = [pad_b(b1, HP), pad_b(b2, HP), pad_b(bh1, HP),
              pad_b(bh2, HP), pad_b(bq, HP)]
    b_packed = jnp.concatenate(
        b_rows + [jnp.zeros((8 - len(b_rows), HP), f32)], axis=0)  # (8, HP)

    return w_packed, b_packed.astype(f32)


# ------------------------------ Host wrapper --------------------------------

def dueling_forward(x, w_packed, b_packed, out_size, *, batch_tile=1024):
    B, in_size = x.shape
    hp = w_packed.shape[1]
    hidden = hp // 2

    # Kernel quantizes activations to bf16 before the MXU anyway; feeding bf16
    # halves x HBM traffic.
    x = x.astype(jnp.bfloat16)

    # Batch tile: large to amortize per-grid-step overhead (~0.35 us/step),
    # but split into >= 2 grid steps when possible so v7x's two TensorCores
    # both get work.  16-row multiple keeps bf16 sublane tiling clean.
    if B <= 8:
        TB = B
    else:
        TB = min(batch_tile, _round_up(pl.cdiv(B, 2), 16))
    grid = (pl.cdiv(B, TB),)

    x_spec = pl.BlockSpec((TB, in_size), lambda i: (i, 0))
    w_spec = pl.BlockSpec(w_packed.shape, lambda i: (0, 0))   # VMEM-resident
    b_spec = pl.BlockSpec(b_packed.shape, lambda i: (0, 0))
    o_spec = pl.BlockSpec((TB, out_size), lambda i: (i, 0))

    nbytes = lambda a: a.size * a.dtype.itemsize
    H = hidden
    flops = 2 * B * (in_size * H + H * H + H * 2 * H + 2 * H * 2 * H
                     + 2 * H * out_size)
    bytes_accessed = (nbytes(x) + nbytes(w_packed) + nbytes(b_packed)
                      + B * out_size * 4)

    kernel = functools.partial(
        dueling_kernel, in_size=in_size, hp=hp, out_size=out_size)

    return pl.pallas_call(
        kernel,
        out_shape=jax.ShapeDtypeStruct((B, out_size), jnp.float32),
        grid=grid,
        in_specs=[x_spec, w_spec, b_spec],
        out_specs=o_spec,
        compiler_params=pltpu.CompilerParams(
            dimension_semantics=("parallel",)),
        cost_estimate=pl.CostEstimate(
            flops=flops, transcendentals=0, bytes_accessed=bytes_accessed),
    )(x, w_packed, b_packed)


# ----------------------- Deterministic parameter init ----------------------

def xavier_uniform(key, fan_in, fan_out):
    limit = jnp.sqrt(6.0 / (fan_in + fan_out))
    return jax.random.uniform(
        key, (fan_in, fan_out), dtype=jnp.float32, minval=-limit, maxval=limit)


def make_params(key, in_size, hidden, out_size):
    ks = jax.random.split(key, 8)
    zeros_row = lambda n: jnp.zeros((1, n), dtype=jnp.float32)
    return (
        # base MLP
        xavier_uniform(ks[0], in_size, hidden), zeros_row(hidden),
        xavier_uniform(ks[1], hidden, hidden), zeros_row(hidden),
        # value head
        xavier_uniform(ks[2], hidden, hidden), zeros_row(hidden),
        xavier_uniform(ks[3], hidden, hidden), zeros_row(hidden),
        xavier_uniform(ks[4], hidden, 1), zeros_row(1),
        # advantage head
        xavier_uniform(ks[5], hidden, hidden), zeros_row(hidden),
        xavier_uniform(ks[6], hidden, hidden), zeros_row(hidden),
        xavier_uniform(ks[7], hidden, out_size), zeros_row(out_size),
    )


# -------------------------- Pure-JAX reference ------------------------------

def dueling_reference(x, params, out_size):
    (w1, b1, w2, b2,
     wv1, bv1, wv2, bv2, wvp, bvp,
     wa1, ba1, wa2, ba2, wap, bap) = params
    relu = lambda t: jnp.maximum(t, 0.0)
    h = relu(x @ w1 + b1)
    h = relu(h @ w2 + b2)
    v = relu(h @ wv1 + bv1)
    v = relu(v @ wv2 + bv2)
    v = v @ wvp + bvp
    a = relu(h @ wa1 + ba1)
    a = relu(a @ wa2 + ba2)
    a = a @ wap + bap
    return v + a - jnp.mean(a, axis=1, keepdims=True)


# --------------------------------- Main --------------------------------------

if __name__ == "__main__":
    B, IN_SIZE, HIDDEN, OUT_SIZE = 8, 16, 64, 4

    key = jax.random.PRNGKey(0)
    kx, kp = jax.random.split(key)
    x = jax.random.normal(kx, (B, IN_SIZE), dtype=jnp.float32)
    params = make_params(kp, IN_SIZE, HIDDEN, OUT_SIZE)

    w_packed, b_packed = pack_params(params, IN_SIZE, HIDDEN, OUT_SIZE)

    out = dueling_forward(x, w_packed, b_packed, OUT_SIZE)
    out = jax.block_until_ready(out)

    # Reference: original (unpacked heads, explicit mean) forward in f32 using
    # the same bf16-quantized weights/activations the kernel sees.  Tolerance
    # covers bf16 MXU inputs (f32 accumulation) and the pre-cast mean fold.
    ref_params = tuple(p.astype(jnp.bfloat16).astype(jnp.float32) for p in params)
    x_q = x.astype(jnp.bfloat16).astype(jnp.float32)
    ref = dueling_reference(x_q, ref_params, OUT_SIZE)

    assert out.shape == (B, OUT_SIZE)
    assert jnp.allclose(out, ref, atol=3e-2, rtol=3e-2), "mismatch vs reference"

    print("KERNEL_OK")
</pallas_src>

<mosaic_0001>
module attributes {stable_mosaic.version = 11 : i64} {
  func.func @dueling_kernel(%arg0: i32, %arg1: memref<8x16xbf16, #tpu.memory_space<vmem>>, %arg2: memref<528x128xbf16, #tpu.memory_space<vmem>>, %arg3: memref<8x128xf32, #tpu.memory_space<vmem>>, %arg4: memref<8x4xf32, #tpu.memory_space<vmem>>) attributes {dimension_semantics = [#tpu.dimension_semantics<parallel>], iteration_bounds = array<i64: 1>, scalar_prefetch = 0 : i64, scratch_operands = 0 : i64, tpu.core_type = #tpu.core_type<tc>, window_params = [{transform_indices = @transform_0, window_bounds = array<i64: 8, 16>}, {pipeline_mode = #tpu.pipeline_mode<synchronous>, transform_indices = @transform_1, window_bounds = array<i64: 528, 128>}, {pipeline_mode = #tpu.pipeline_mode<synchronous>, transform_indices = @transform_2, window_bounds = array<i64: 8, 128>}, {transform_indices = @transform_3, window_bounds = array<i64: 8, 4>}]} {
    %c0 = arith.constant 0 : index
    %c0_0 = arith.constant 0 : index
    %0 = vector.load %arg1[%c0, %c0_0] : memref<8x16xbf16, #tpu.memory_space<vmem>>, vector<8x16xbf16>
    %c0_1 = arith.constant 0 : index
    %c0_2 = arith.constant 0 : index
    %1 = vector.load %arg2[%c0_1, %c0_2] : memref<528x128xbf16, #tpu.memory_space<vmem>>, vector<16x128xbf16>
    %cst = arith.constant dense<0.000000e+00> : vector<8x128xf32>
    %2 = tpu.matmul %0, %1, %cst {dimension_numbers = #tpu.dot_dimension_numbers<[1], [0], [0], [1], [0, 0, 1, 1], [], []>} : vector<8x16xbf16>, vector<16x128xbf16>, vector<8x128xf32> -> vector<8x128xf32>
    %c0_3 = arith.constant 0 : index
    %c0_4 = arith.constant 0 : index
    %3 = vector.load %arg3[%c0_3, %c0_4] : memref<8x128xf32, #tpu.memory_space<vmem>>, vector<1x128xf32>
    %4 = vector.broadcast %3 : vector<1x128xf32> to vector<8x128xf32>
    %5 = arith.addf %2, %4 : vector<8x128xf32>
    %cst_5 = arith.constant 0.000000e+00 : f32
    %6 = vector.broadcast %cst_5 : f32 to vector<8x128xf32>
    %7 = arith.maximumf %5, %6 : vector<8x128xf32>
    %c16 = arith.constant 16 : index
    %c0_6 = arith.constant 0 : index
    %8 = vector.load %arg2[%c16, %c0_6] : memref<528x128xbf16, #tpu.memory_space<vmem>>, vector<128x128xbf16>
    %9 = arith.truncf %7 : vector<8x128xf32> to vector<8x128xbf16>
    %cst_7 = arith.constant dense<0.000000e+00> : vector<8x128xf32>
    %10 = tpu.matmul %9, %8, %cst_7 {dimension_numbers = #tpu.dot_dimension_numbers<[1], [0], [0], [1], [0, 0, 1, 1], [], []>} : vector<8x128xbf16>, vector<128x128xbf16>, vector<8x128xf32> -> vector<8x128xf32>
    %c1 = arith.constant 1 : index
    %c0_8 = arith.constant 0 : index
    %11 = vector.load %arg3[%c1, %c0_8] : memref<8x128xf32, #tpu.memory_space<vmem>>, vector<1x128xf32>
    %12 = vector.broadcast %11 : vector<1x128xf32> to vector<8x128xf32>
    %13 = arith.addf %10, %12 : vector<8x128xf32>
    %cst_9 = arith.constant 0.000000e+00 : f32
    %14 = vector.broadcast %cst_9 : f32 to vector<8x128xf32>
    %15 = arith.maximumf %13, %14 : vector<8x128xf32>
    %c144 = arith.constant 144 : index
    %c0_10 = arith.constant 0 : index
    %16 = vector.load %arg2[%c144, %c0_10] : memref<528x128xbf16, #tpu.memory_space<vmem>>, vector<128x128xbf16>
    %17 = arith.truncf %15 : vector<8x128xf32> to vector<8x128xbf16>
    %cst_11 = arith.constant dense<0.000000e+00> : vector<8x128xf32>
    %18 = tpu.matmul %17, %16, %cst_11 {dimension_numbers = #tpu.dot_dimension_numbers<[1], [0], [0], [1], [0, 0, 1, 1], [], []>} : vector<8x128xbf16>, vector<128x128xbf16>, vector<8x128xf32> -> vector<8x128xf32>
    %c2 = arith.constant 2 : index
    %c0_12 = arith.constant 0 : index
    %19 = vector.load %arg3[%c2, %c0_12] : memref<8x128xf32, #tpu.memory_space<vmem>>, vector<1x128xf32>
    %20 = vector.broadcast %19 : vector<1x128xf32> to vector<8x128xf32>
    %21 = arith.addf %18, %20 : vector<8x128xf32>
    %cst_13 = arith.constant 0.000000e+00 : f32
    %22 = vector.broadcast %cst_13 : f32 to vector<8x128xf32>
    %23 = arith.maximumf %21, %22 : vector<8x128xf32>
    %c272 = arith.constant 272 : index
    %c0_14 = arith.constant 0 : index
    %24 = vector.load %arg2[%c272, %c0_14] : memref<528x128xbf16, #tpu.memory_space<vmem>>, vector<128x128xbf16>
    %25 = arith.truncf %23 : vector<8x128xf32> to vector<8x128xbf16>
    %cst_15 = arith.constant dense<0.000000e+00> : vector<8x128xf32>
    %26 = tpu.matmul %25, %24, %cst_15 {dimension_numbers = #tpu.dot_dimension_numbers<[1], [0], [0], [1], [0, 0, 1, 1], [], []>} : vector<8x128xbf16>, vector<128x128xbf16>, vector<8x128xf32> -> vector<8x128xf32>
    %c3 = arith.constant 3 : index
    %c0_16 = arith.constant 0 : index
    %27 = vector.load %arg3[%c3, %c0_16] : memref<8x128xf32, #tpu.memory_space<vmem>>, vector<1x128xf32>
    %28 = vector.broadcast %27 : vector<1x128xf32> to vector<8x128xf32>
    %29 = arith.addf %26, %28 : vector<8x128xf32>
    %cst_17 = arith.constant 0.000000e+00 : f32
    %30 = vector.broadcast %cst_17 : f32 to vector<8x128xf32>
    %31 = arith.maximumf %29, %30 : vector<8x128xf32>
    %c400 = arith.constant 400 : index
    %c0_18 = arith.constant 0 : index
    %32 = vector.load %arg2[%c400, %c0_18] : memref<528x128xbf16, #tpu.memory_space<vmem>>, vector<128x128xbf16>
    %33 = arith.truncf %31 : vector<8x128xf32> to vector<8x128xbf16>
    %cst_19 = arith.constant dense<0.000000e+00> : vector<8x128xf32>
    %34 = tpu.matmul %33, %32, %cst_19 {dimension_numbers = #tpu.dot_dimension_numbers<[1], [0], [0], [1], [0, 0, 1, 1], [], []>} : vector<8x128xbf16>, vector<128x128xbf16>, vector<8x128xf32> -> vector<8x128xf32>
    %c4 = arith.constant 4 : index
    %c0_20 = arith.constant 0 : index
    %35 = vector.load %arg3[%c4, %c0_20] : memref<8x128xf32, #tpu.memory_space<vmem>>, vector<1x128xf32>
    %36 = vector.broadcast %35 : vector<1x128xf32> to vector<8x128xf32>
    %37 = arith.addf %34, %36 : vector<8x128xf32>
    %38 = vector.extract_strided_slice %37 {offsets = [0, 0], sizes = [8, 4], strides = [1, 1]} : vector<8x128xf32> to vector<8x4xf32>
    %c0_21 = arith.constant 0 : index
    %c0_22 = arith.constant 0 : index
    %39 = vector.load %arg4[%c0_21, %c0_22] : memref<8x4xf32, #tpu.memory_space<vmem>>, vector<8x4xf32>
    tpu.vector_store %arg4[%c0_21, %c0_22], %38 {strides = array<i32>} : memref<8x4xf32, #tpu.memory_space<vmem>>, vector<8x4xf32>,
    return
  }
  func.func @transform_0(%arg0: i32) -> (i32, i32) {
    %c0_i32 = arith.constant 0 : i32
    %c0_i32_0 = arith.constant 0 : i32
    return %arg0, %c0_i32 : i32, i32
  }
  func.func @transform_1(%arg0: i32) -> (i32, i32) {
    %c0_i32 = arith.constant 0 : i32
    %c0_i32_0 = arith.constant 0 : i32
    %c0_i32_1 = arith.constant 0 : i32
    return %c0_i32, %c0_i32_0 : i32, i32
  }
  func.func @transform_2(%arg0: i32) -> (i32, i32) {
    %c0_i32 = arith.constant 0 : i32
    %c0_i32_0 = arith.constant 0 : i32
    %c0_i32_1 = arith.constant 0 : i32
    return %c0_i32, %c0_i32_0 : i32, i32
  }
  func.func @transform_3(%arg0: i32) -> (i32, i32) {
    %c0_i32 = arith.constant 0 : i32
    %c0_i32_0 = arith.constant 0 : i32
    return %arg0, %c0_i32 : i32, i32
  }
}

</mosaic_0001>

<llo_original>
// kernel: tpu_custom_call.1
$region0: #{tpu_custom_call.1}
  #allocation0 [shape = 'u32[]', space=smem, size = 0x4, offset = 0x4, fixed_abs, tag = 'smem constant byte address 0x4 - core index']
  #allocation1 [shape = 'u32[72,128]{1,0:T(1,128)}', space=vmem, size = 0x9000, scoped, tag = 'internal scratch']
  %s0 = inlined_call_operand.hbm [shape: bf16[8,16], index: 0, kind: input, shape index: {}]
  %s1 = inlined_call_operand.hbm [shape: bf16[528,128], index: 1, kind: input, shape index: {}]
  %s2 = inlined_call_operand.hbm [shape: f32[8,128], index: 2, kind: input, shape index: {}]
  %s3 = inlined_call_operand.vmem [shape: f32[8,4], index: 3, kind: output, shape index: {}]
  %s4 = sld [smem:[#allocation0]]
  $region34: #{tpu_custom_call.1} parent=0
    _
  %s6 = ssub.s32 1, %s4
  %s7 = scalar_select 0, %s6, %s4
  $region1: #{tpu_custom_call.1} parent=0
    #allocation2 [shape = 'u8[2048]{0}', space=vmem, size = 0x800, scoped, tag = 'input window, operand 0, single buffered']
    #allocation3 [shape = 's32[1]{0}', space=sflag, size = 0x4, scoped, tag = 'scoped memory for tpu_custom_call.1']
    #allocation4 [shape = 'u8[135168]{0}', space=vmem, size = 0x21000, scoped, tag = 'input window, operand 1, single buffered']
    #allocation5 [shape = 's32[1]{0}', space=sflag, size = 0x4, scoped, tag = 'scoped memory for tpu_custom_call.1']
    #allocation6 [shape = 'u8[4096]{0}', space=vmem, size = 0x1000, scoped, tag = 'input window, operand 2, single buffered']
    %8 = vsyncpa [#allocation3], 0
    %9 = vsyncpa [#allocation5], 0
    // Predicated region
    $region2: #{tpu_custom_call.1} parent=1 // pred_check
      _
    $region3: #{tpu_custom_call.1} parent=1 // pred_check_branch
      %11 = sbr.rel (0) target = $region5
    $region4: #{tpu_custom_call.1} parent=1 // pred_region
      %13 = vsyncadd [#allocation3], 0
      %s15 = sshll.u32 %s0, 4
      %s16 = int_to_ptr.hbm [resolvable:$true] %s15
      %s17 = sshll.u32 [#allocation2], 4
      %s18 = int_to_ptr.vmem [resolvable:$true] %s17
      %20 = dma.hbm_to_vmem [thread:$0]  %s16, 64, %s18, [#allocation3]
    $region5: #{tpu_custom_call.1} parent=1 // pred_fallthru
      _
    // Predicated region
    $region6: #{tpu_custom_call.1} parent=1 // pred_check
      _
    $region7: #{tpu_custom_call.1} parent=1 // pred_check_branch
      %22 = sbr.rel (0) target = $region9
    $region8: #{tpu_custom_call.1} parent=1 // pred_region
      %24 = vsyncadd [#allocation5], 0
      %s25 = sshll.u32 %s1, 4
      %s26 = int_to_ptr.hbm [resolvable:$true] %s25
      %s27 = sshll.u32 [#allocation4], 4
      %s28 = int_to_ptr.vmem [resolvable:$true] %s27
      %33 = dma.hbm_to_vmem [thread:$0]  %s26, 4224, %s28, [#allocation5], 64, 64, 4
    $region9: #{tpu_custom_call.1} parent=1 // pred_fallthru
      _
    // Predicated region
    $region10: #{tpu_custom_call.1} parent=1 // pred_check
      _
    $region11: #{tpu_custom_call.1} parent=1 // pred_check_branch
      %35 = sbr.rel (0) target = $region13
    $region12: #{tpu_custom_call.1} parent=1 // pred_region
      %37 = vsyncadd [#allocation5], 0
      %s39 = sshll.u32 %s2, 4
      %s40 = int_to_ptr.hbm [resolvable:$true] %s39
      %s41 = sshll.u32 [#allocation6], 4
      %s42 = int_to_ptr.vmem [resolvable:$true] %s41
      %44 = dma.hbm_to_vmem [thread:$0]  %s40, 128, %s42, [#allocation5]
    $region13: #{tpu_custom_call.1} parent=1 // pred_fallthru
      _
    // Predicated region
    $region14: #{tpu_custom_call.1} parent=1 // pred_check
      _
    $region15: #{tpu_custom_call.1} parent=1 // pred_check_branch
      %46 = sbr.rel (0) target = $region17
    $region16: #{tpu_custom_call.1} parent=1 // pred_region
      %48 = dma.done [#allocation3], 64
    $region17: #{tpu_custom_call.1} parent=1 // pred_fallthru
      _
    // Predicated region
    $region18: #{tpu_custom_call.1} parent=1 // pred_check
      _
    $region19: #{tpu_custom_call.1} parent=1 // pred_check_branch
      %50 = sbr.rel (0) target = $region21
    $region20: #{tpu_custom_call.1} parent=1 // pred_region
      %52 = dma.done [#allocation5], 4224
    $region21: #{tpu_custom_call.1} parent=1 // pred_fallthru
      _
    // Predicated region
    $region22: #{tpu_custom_call.1} parent=1 // pred_check
      _
    $region23: #{tpu_custom_call.1} parent=1 // pred_check_branch
      %54 = sbr.rel (0) target = $region25
    $region24: #{tpu_custom_call.1} parent=1 // pred_region
      %56 = dma.done [#allocation5], 128
    $region25: #{tpu_custom_call.1} parent=1 // pred_fallthru
      _
    %v58 = vld [vmem:[#allocation2] sm:$0xf]
    %v59 = vld [vmem:[#allocation4] sm:$0xf]
    %v60 = vld [vmem:[#allocation4 + $0x4] sm:$0xf]
    %v61 = vld [vmem:[#allocation6] sm:$0x1]
    %v62 = vperm.slane %v61, 0
    %v65 = vunpack.c.l.b16 %v59
    %v66 = vunpack.c.l.b16 %v60
    %v67 = vpack.c.b16 %v66, %v65
    %vm69 = vcmask 130048
    %v71 = vsel %vm69, %v58, 0
    %73 = vmatpush.bf16.msra.mxu0 0
    %74 = vmatpush.bf16.msra.mxu0 0
    %75 = vmatpush.bf16.msra.mxu0 0
    %76 = vmatpush.bf16.msra.mxu0 0
    %77 = vmatpush.bf16.msra.mxu0 0
    %78 = vmatpush.bf16.msra.mxu0 0
    %79 = vmatpush.bf16.msra.mxu0 0
    %80 = vmatpush.bf16.msra.mxu0 %v67
    %81 = vmatmul.bf16.gmra.mxu0 %v71
    %v82 = vpop.f32.mrf.mxu0
    %v83 = vadd.f32 %v62, %v82
    %v84 = vpop.f32.mrf.mxu0
    %85 = vdwg.mxu0
    %v86 = vmax.f32 %v83, 0.0
    %v87 = vld [vmem:[#allocation4 + $0x8] sm:$0xf]
    %v88 = vld [vmem:[#allocation4 + $0xc] sm:$0xf]
    %v89 = vld [vmem:[#allocation4 + $0x10] sm:$0xf]
    %v90 = vld [vmem:[#allocation4 + $0x14] sm:$0xf]
    %v91 = vld [vmem:[#allocation4 + $0x18] sm:$0xf]
    %v92 = vld [vmem:[#allocation4 + $0x1c] sm:$0xf]
    %v93 = vld [vmem:[#allocation4 + $0x20] sm:$0xf]
    %v94 = vld [vmem:[#allocation4 + $0x24] sm:$0xf]
    %v95 = vld [vmem:[#allocation4 + $0x28] sm:$0xf]
    %v96 = vld [vmem:[#allocation4 + $0x2c] sm:$0xf]
    %v97 = vld [vmem:[#allocation4 + $0x30] sm:$0xf]
    %v98 = vld [vmem:[#allocation4 + $0x34] sm:$0xf]
    %v99 = vld [vmem:[#allocation4 + $0x38] sm:$0xf]
    %v100 = vld [vmem:[#allocation4 + $0x3c] sm:$0xf]
    %v101 = vld [vmem:[#allocation4 + $0x40] sm:$0xf]
    %v102 = vld [vmem:[#allocation4 + $0x44] sm:$0xf]
    %v103 = vpack.c.bf16 %v86, %v86
    %v104 = vld [vmem:[#allocation6 + $0x1] sm:$0x1]
    %v105 = vperm.slane %v104, 0
    %v122 = vunpack.c.l.b16 %v87
    %v123 = vunpack.c.l.b16 %v88
    %v124 = vunpack.c.l.b16 %v89
    %v125 = vunpack.c.l.b16 %v90
    %v126 = vunpack.c.l.b16 %v91
    %v127 = vunpack.c.l.b16 %v92
    %v128 = vunpack.c.l.b16 %v93
    %v129 = vunpack.c.l.b16 %v94
    %v130 = vunpack.c.l.b16 %v95
    %v131 = vunpack.c.l.b16 %v96
    %v132 = vunpack.c.l.b16 %v97
    %v133 = vunpack.c.l.b16 %v98
    %v134 = vunpack.c.l.b16 %v99
    %v135 = vunpack.c.l.b16 %v100
    %v136 = vunpack.c.l.b16 %v101
    %v137 = vunpack.c.l.b16 %v102
    %v138 = vpack.c.b16 %v123, %v122
    %v139 = vpack.c.b16 %v125, %v124
    %v140 = vpack.c.b16 %v127, %v126
    %v141 = vpack.c.b16 %v129, %v128
    %v142 = vpack.c.b16 %v131, %v130
    %v143 = vpack.c.b16 %v133, %v132
    %v144 = vpack.c.b16 %v135, %v134
    %v145 = vpack.c.b16 %v137, %v136
    %154 = vmatpush.bf16.msra.mxu0 %v145
    %155 = vmatpush.bf16.msra.mxu0 %v144
    %156 = vmatpush.bf16.msra.mxu0 %v143
    %157 = vmatpush.bf16.msra.mxu0 %v142
    %158 = vmatpush.bf16.msra.mxu0 %v141
    %159 = vmatpush.bf16.msra.mxu0 %v140
    %160 = vmatpush.bf16.msra.mxu0 %v139
    %161 = vmatpush.bf16.msra.mxu0 %v138
    %162 = vmatmul.bf16.gmra.mxu0 %v103
    %v163 = vpop.f32.mrf.mxu0
    %v164 = vadd.f32 %v105, %v163
    %v165 = vpop.f32.mrf.mxu0
    %166 = vdwg.mxu0
    %v167 = vmax.f32 %v164, 0.0
    %v168 = vld [vmem:[#allocation4 + $0x48] sm:$0xf]
    %v169 = vld [vmem:[#allocation4 + $0x4c] sm:$0xf]
    %v170 = vld [vmem:[#allocation4 + $0x50] sm:$0xf]
    %v171 = vld [vmem:[#allocation4 + $0x54] sm:$0xf]
    %v172 = vld [vmem:[#allocation4 + $0x58] sm:$0xf]
    %v173 = vld [vmem:[#allocation4 + $0x5c] sm:$0xf]
    %v174 = vld [vmem:[#allocation4 + $0x60] sm:$0xf]
    %v175 = vld [vmem:[#allocation4 + $0x64] sm:$0xf]
    %v176 = vld [vmem:[#allocation4 + $0x68] sm:$0xf]
    %v177 = vld [vmem:[#allocation4 + $0x6c] sm:$0xf]
    %v178 = vld [vmem:[#allocation4 + $0x70] sm:$0xf]
    %v179 = vld [vmem:[#allocation4 + $0x74] sm:$0xf]
    %v180 = vld [vmem:[#allocation4 + $0x78] sm:$0xf]
    %v181 = vld [vmem:[#allocation4 + $0x7c] sm:$0xf]
    %v182 = vld [vmem:[#allocation4 + $0x80] sm:$0xf]
    %v183 = vld [vmem:[#allocation4 + $0x84] sm:$0xf]
    %v184 = vpack.c.bf16 %v167, %v167
    %v185 = vld [vmem:[#allocation6 + $0x2] sm:$0x1]
    %v186 = vperm.slane %v185, 0
    %v203 = vunpack.c.l.b16 %v168
    %v204 = vunpack.c.l.b16 %v169
    %v205 = vunpack.c.l.b16 %v170
    %v206 = vunpack.c.l.b16 %v171
    %v207 = vunpack.c.l.b16 %v172
    %v208 = vunpack.c.l.b16 %v173
    %v209 = vunpack.c.l.b16 %v174
    %v210 = vunpack.c.l.b16 %v175
    %v211 = vunpack.c.l.b16 %v176
    %v212 = vunpack.c.l.b16 %v177
    %v213 = vunpack.c.l.b16 %v178
    %v214 = vunpack.c.l.b16 %v179
    %v215 = vunpack.c.l.b16 %v180
    %v216 = vunpack.c.l.b16 %v181
    %v217 = vunpack.c.l.b16 %v182
    %v218 = vunpack.c.l.b16 %v183
    %v219 = vpack.c.b16 %v204, %v203
    %v220 = vpack.c.b16 %v206, %v205
    %v221 = vpack.c.b16 %v208, %v207
    %v222 = vpack.c.b16 %v210, %v209
    %v223 = vpack.c.b16 %v212, %v211
    %v224 = vpack.c.b16 %v214, %v213
    %v225 = vpack.c.b16 %v216, %v215
    %v226 = vpack.c.b16 %v218, %v217
    %235 = vmatpush.bf16.msra.mxu0 %v226
    %236 = vmatpush.bf16.msra.mxu0 %v225
    %237 = vmatpush.bf16.msra.mxu0 %v224
    %238 = vmatpush.bf16.msra.mxu0 %v223
    %239 = vmatpush.bf16.msra.mxu0 %v222
    %240 = vmatpush.bf16.msra.mxu0 %v221
    %241 = vmatpush.bf16.msra.mxu0 %v220
    %242 = vmatpush.bf16.msra.mxu0 %v219
    %243 = vmatmul.bf16.gmra.mxu0 %v184
    %v244 = vpop.f32.mrf.mxu0
    %v245 = vadd.f32 %v186, %v244
    %v246 = vpop.f32.mrf.mxu0
    %247 = vdwg.mxu0
    %v248 = vmax.f32 %v245, 0.0
    %v249 = vld [vmem:[#allocation4 + $0x88] sm:$0xf]
    %v250 = vld [vmem:[#allocation4 + $0x8c] sm:$0xf]
    %v251 = vld [vmem:[#allocation4 + $0x90] sm:$0xf]
    %v252 = vld [vmem:[#allocation4 + $0x94] sm:$0xf]
    %v253 = vld [vmem:[#allocation4 + $0x98] sm:$0xf]
    %v254 = vld [vmem:[#allocation4 + $0x9c] sm:$0xf]
    %v255 = vld [vmem:[#allocation4 + $0xa0] sm:$0xf]
    %v256 = vld [vmem:[#allocation4 + $0xa4] sm:$0xf]
    %v257 = vld [vmem:[#allocation4 + $0xa8] sm:$0xf]
    %v258 = vld [vmem:[#allocation4 + $0xac] sm:$0xf]
    %v259 = vld [vmem:[#allocation4 + $0xb0] sm:$0xf]
    %v260 = vld [vmem:[#allocation4 + $0xb4] sm:$0xf]
    %v261 = vld [vmem:[#allocation4 + $0xb8] sm:$0xf]
    %v262 = vld [vmem:[#allocation4 + $0xbc] sm:$0xf]
    %v263 = vld [vmem:[#allocation4 + $0xc0] sm:$0xf]
    %v264 = vld [vmem:[#allocation4 + $0xc4] sm:$0xf]
    %v265 = vpack.c.bf16 %v248, %v248
    %v266 = vld [vmem:[#allocation6 + $0x3] sm:$0x1]
    %v267 = vperm.slane %v266, 0
    %v284 = vunpack.c.l.b16 %v249
    %v285 = vunpack.c.l.b16 %v250
    %v286 = vunpack.c.l.b16 %v251
    %v287 = vunpack.c.l.b16 %v252
    %v288 = vunpack.c.l.b16 %v253
    %v289 = vunpack.c.l.b16 %v254
    %v290 = vunpack.c.l.b16 %v255
    %v291 = vunpack.c.l.b16 %v256
    %v292 = vunpack.c.l.b16 %v257
    %v293 = vunpack.c.l.b16 %v258
    %v294 = vunpack.c.l.b16 %v259
    %v295 = vunpack.c.l.b16 %v260
    %v296 = vunpack.c.l.b16 %v261
    %v297 = vunpack.c.l.b16 %v262
    %v298 = vunpack.c.l.b16 %v263
    %v299 = vunpack.c.l.b16 %v264
    %v300 = vpack.c.b16 %v285, %v284
    %v301 = vpack.c.b16 %v287, %v286
    %v302 = vpack.c.b16 %v289, %v288
    %v303 = vpack.c.b16 %v291, %v290
    %v304 = vpack.c.b16 %v293, %v292
    %v305 = vpack.c.b16 %v295, %v294
    %v306 = vpack.c.b16 %v297, %v296
    %v307 = vpack.c.b16 %v299, %v298
    %316 = vmatpush.bf16.msra.mxu0 %v307
    %317 = vmatpush.bf16.msra.mxu0 %v306
    %318 = vmatpush.bf16.msra.mxu0 %v305
    %319 = vmatpush.bf16.msra.mxu0 %v304
    %320 = vmatpush.bf16.msra.mxu0 %v303
    %321 = vmatpush.bf16.msra.mxu0 %v302
    %322 = vmatpush.bf16.msra.mxu0 %v301
    %323 = vmatpush.bf16.msra.mxu0 %v300
    %324 = vmatmul.bf16.gmra.mxu0 %v265
    %v325 = vpop.f32.mrf.mxu0
    %v326 = vadd.f32 %v267, %v325
    %v327 = vpop.f32.mrf.mxu0
    %328 = vdwg.mxu0
    %v329 = vmax.f32 %v326, 0.0
    %v330 = vld [vmem:[#allocation4 + $0xc8] sm:$0xf]
    %v331 = vld [vmem:[#allocation4 + $0xcc] sm:$0xf]
    %v332 = vld [vmem:[#allocation4 + $0xd0] sm:$0xf]
    %v333 = vld [vmem:[#allocation4 + $0xd4] sm:$0xf]
    %v334 = vld [vmem:[#allocation4 + $0xd8] sm:$0xf]
    %v335 = vld [vmem:[#allocation4 + $0xdc] sm:$0xf]
    %v336 = vld [vmem:[#allocation4 + $0xe0] sm:$0xf]
    %v337 = vld [vmem:[#allocation4 + $0xe4] sm:$0xf]
    %v338 = vld [vmem:[#allocation4 + $0xe8] sm:$0xf]
    %v339 = vld [vmem:[#allocation4 + $0xec] sm:$0xf]
    %v340 = vld [vmem:[#allocation4 + $0xf0] sm:$0xf]
    %v341 = vld [vmem:[#allocation4 + $0xf4] sm:$0xf]
    %v342 = vld [vmem:[#allocation4 + $0xf8] sm:$0xf]
    %v343 = vld [vmem:[#allocation4 + $0xfc] sm:$0xf]
    %v344 = vld [vmem:[#allocation4 + $0x100] sm:$0xf]
    %v345 = vld [vmem:[#allocation4 + $0x104] sm:$0xf]
    %v346 = vpack.c.bf16 %v329, %v329
    %v347 = vld [vmem:[#allocation6 + $0x4] sm:$0x1]
    %v348 = vperm.slane %v347, 0
    %v365 = vunpack.c.l.b16 %v330
    %v366 = vunpack.c.l.b16 %v331
    %v367 = vunpack.c.l.b16 %v332
    %v368 = vunpack.c.l.b16 %v333
    %v369 = vunpack.c.l.b16 %v334
    %v370 = vunpack.c.l.b16 %v335
    %v371 = vunpack.c.l.b16 %v336
    %v372 = vunpack.c.l.b16 %v337
    %v373 = vunpack.c.l.b16 %v338
    %v374 = vunpack.c.l.b16 %v339
    %v375 = vunpack.c.l.b16 %v340
    %v376 = vunpack.c.l.b16 %v341
    %v377 = vunpack.c.l.b16 %v342
    %v378 = vunpack.c.l.b16 %v343
    %v379 = vunpack.c.l.b16 %v344
    %v380 = vunpack.c.l.b16 %v345
    %v381 = vpack.c.b16 %v366, %v365
    %v382 = vpack.c.b16 %v368, %v367
    %v383 = vpack.c.b16 %v370, %v369
    %v384 = vpack.c.b16 %v372, %v371
    %v385 = vpack.c.b16 %v374, %v373
    %v386 = vpack.c.b16 %v376, %v375
    %v387 = vpack.c.b16 %v378, %v377
    %v388 = vpack.c.b16 %v380, %v379
    %397 = vmatpush.bf16.msra.mxu0 %v388
    %398 = vmatpush.bf16.msra.mxu0 %v387
    %399 = vmatpush.bf16.msra.mxu0 %v386
    %400 = vmatpush.bf16.msra.mxu0 %v385
    %401 = vmatpush.bf16.msra.mxu0 %v384
    %402 = vmatpush.bf16.msra.mxu0 %v383
    %403 = vmatpush.bf16.msra.mxu0 %v382
    %404 = vmatpush.bf16.msra.mxu0 %v381
    %405 = vmatmul.bf16.gmra.mxu0 %v346
    %v406 = vpop.f32.mrf.mxu0
    %v407 = vadd.f32 %v348, %v406
    %v408 = vpop.f32.mrf.mxu0
    %409 = vdwg.mxu0
    %vm410 = vcmask 31744
    %411 = vst.msk [vmem:[%s3] sm:$0xff] %vm410, %v407
    // Predicated region
    $region26: #{tpu_custom_call.1} parent=1 // pred_check
      _
    $region27: #{tpu_custom_call.1} parent=1 // pred_check_branch
      %413 = sbr.rel (0) target = $region29
    $region28: #{tpu_custom_call.1} parent=1 // pred_region
      _
    $region29: #{tpu_custom_call.1} parent=1 // pred_fallthru
      _
    // Predicated region
    $region30: #{tpu_custom_call.1} parent=1 // pred_check
      _
    $region31: #{tpu_custom_call.1} parent=1 // pred_check_branch
      %415 = sbr.rel (0) target = $region33
    $region32: #{tpu_custom_call.1} parent=1 // pred_region
      _
    $region33: #{tpu_custom_call.1} parent=1 // pred_fallthru
      _
    %416 = vsyncpa [#allocation3], 1
    %417 = vsyncpa [#allocation5], 1

</llo_original>
